<compile_context>
chip_gen: v7x
topology: tpu7x:2x2x1
jax: 0.10.0
libtpu: 0.0.40
codegen_flags: <defaults>
</compile_context>

<pallas_src>
import math
import functools

import jax
import jax.numpy as jnp
from jax.experimental import pallas as pl
from jax.experimental.pallas import tpu as pltpu


# ---------------- parameter setup (plain JAX, done once) ----------------

def _make_pe(d_model: int, max_len: int) -> jnp.ndarray:
    """Sinusoidal positional-encoding table, shape (max_len, 1, d_model)."""
    position = jnp.arange(0, max_len, dtype=jnp.float32)[:, None]            # (max_len, 1)
    div_term = jnp.exp(jnp.arange(0, d_model, 2, dtype=jnp.float32)
                       * (-math.log(10000.0) / d_model))                     # (d_model/2,)
    pe = jnp.zeros((max_len, d_model), dtype=jnp.float32)
    pe = pe.at[:, 0::2].set(jnp.sin(position * div_term))
    pe = pe.at[:, 1::2].set(jnp.cos(position * div_term))
    return pe[:, None, :]                                                    # (max_len, 1, d_model)


_GOLDEN_I32 = -1640531527        # 0x9E3779B9 reinterpreted as signed int32
_VMEM_LIMIT = 32 * 1024 * 1024   # explicit scoped-VMEM limit; safe on v5e/v6e/v7x


# ---------------- kernels ----------------

def _pe_add_kernel(x_ref, pe_ref, o_ref):
    # x_ref: (TS, B, D), pe_ref: (TS, 1, D) -> broadcasted add over batch axis.
    o_ref[...] = (x_ref[...] + pe_ref[...]).astype(o_ref.dtype)


def _pe_add_dropout_kernel(seed_ref, x_ref, pe_ref, o_ref, *,
                           threshold, inv_keep, block_elems):
    # Training-mode dropout: keep with prob (1-p), scale kept values by 1/(1-p).
    y = x_ref[...] + pe_ref[...]
    shape = y.shape  # (TS, B, D)

    # Global per-element counter (int32). For extremely large S*B*D (> 2^31) the
    # counter wraps, which is acceptable for a dropout mask.
    i0 = jax.lax.broadcasted_iota(jnp.int32, shape, 0)
    i1 = jax.lax.broadcasted_iota(jnp.int32, shape, 1)
    i2 = jax.lax.broadcasted_iota(jnp.int32, shape, 2)
    lin = i0 * (shape[1] * shape[2]) + i1 * shape[2] + i2
    g = lin + pl.program_id(0) * block_elems + seed_ref[0] * _GOLDEN_I32

    # lowbias32 integer hash -> uniform 32 random bits per element.
    h = g.astype(jnp.uint32)
    h = h ^ (h >> 16)
    h = h * jnp.uint32(0x7FEB352D)
    h = h ^ (h >> 15)
    h = h * jnp.uint32(0x846CA68B)
    h = h ^ (h >> 16)

    # Integer-threshold compare: top-31 bits uniform in [0, 2^31);
    # keep iff v >= round(p * 2^31)  ==> P(keep) = 1 - p.
    v = (h >> 1).astype(jnp.int32)
    keep = v >= jnp.int32(threshold)

    scale = jnp.asarray(inv_keep, dtype=y.dtype)
    o_ref[...] = jnp.where(keep, y * scale, jnp.zeros_like(y)).astype(o_ref.dtype)


# ---------------- wrapper ----------------

class PositionalEncoding:
    def __init__(self, d_model: int, dropout: float = 0.1, max_len: int = 5000):
        self.p = float(dropout)
        self.d_model = d_model
        self.pe = _make_pe(d_model, max_len)   # (max_len, 1, d_model), float32

    @staticmethod
    def _tile_rows(S: int, B: int, D: int, itemsize: int) -> int:
        """Rows of x per block, targeting ~2-4 MiB blocks (generation-aware)."""
        try:
            vmem = pltpu.get_tpu_info().vmem_capacity_bytes
        except Exception:
            vmem = 128 << 20
        target = (2 << 20) if vmem <= (64 << 20) else (4 << 20)  # v7x vs v5e/v6e
        rows = max(1, target // max(1, B * D * itemsize))
        if rows >= 8:
            rows -= rows % 8
        return int(min(S, rows))

    def __call__(self, x, *, training: bool = False, seed: int = 0):
        S, B, D = x.shape
        pe = self.pe[:S].astype(x.dtype)            # (S, 1, D), halves pe traffic for bf16
        ts = self._tile_rows(S, B, D, x.dtype.itemsize)
        grid = (pl.cdiv(S, ts),)

        x_spec = pl.BlockSpec((ts, B, D), lambda i, *_: (i, 0, 0))
        pe_spec = pl.BlockSpec((ts, 1, D), lambda i, *_: (i, 0, 0))
        out_spec = pl.BlockSpec((ts, B, D), lambda i, *_: (i, 0, 0))
        out_shape = jax.ShapeDtypeStruct((S, B, D), x.dtype)
        cparams = pltpu.CompilerParams(dimension_semantics=("parallel",),
                                       vmem_limit_bytes=_VMEM_LIMIT)

        if (not training) or self.p == 0.0:
            # eval mode (or p == 0): dropout is identity.
            return pl.pallas_call(
                _pe_add_kernel,
                out_shape=out_shape,
                grid_spec=pltpu.PrefetchScalarGridSpec(
                    num_scalar_prefetch=0,
                    grid=grid,
                    in_specs=[x_spec, pe_spec],
                    out_specs=out_spec,
                ),
                compiler_params=cparams,
            )(x, pe)

        if self.p >= 1.0:
            return jnp.zeros_like(x)

        threshold = min(int(round(self.p * (1 << 31))), (1 << 31) - 1)
        kernel = functools.partial(
            _pe_add_dropout_kernel,
            threshold=threshold,
            inv_keep=1.0 / (1.0 - self.p),
            block_elems=ts * B * D,
        )
        seed_arr = jnp.asarray([seed], dtype=jnp.int32)
        return pl.pallas_call(
            kernel,
            out_shape=out_shape,
            grid_spec=pltpu.PrefetchScalarGridSpec(
                num_scalar_prefetch=1,
                grid=grid,
                in_specs=[x_spec, pe_spec],
                out_specs=out_spec,
            ),
            compiler_params=cparams,
        )(seed_arr, x, pe)


if __name__ == "__main__":
    d_model = 128   # multiple of 128 -> lane-dense stores
    seq_len = 8
    batch = 2
    max_len = 64

    key = jax.random.PRNGKey(0)
    x = jax.random.normal(key, (seq_len, batch, d_model), dtype=jnp.float32)

    module = PositionalEncoding(d_model, dropout=0.1, max_len=max_len)

    # eval-mode forward (dropout == identity), same semantics as module.eval()
    out = jax.block_until_ready(module(x, training=False))
    ref = x + module.pe[:seq_len]
    assert out.shape == x.shape and out.dtype == x.dtype
    assert jnp.allclose(out, ref, atol=1e-6), "mismatch vs reference (eval path)"

    # training-mode forward: every output element must be 0 or (x+pe)/(1-p)
    out_tr = jax.block_until_ready(module(x, training=True, seed=123))
    assert out_tr.shape == x.shape and out_tr.dtype == x.dtype
    scale = 1.0 / (1.0 - module.p)
    ok = jnp.logical_or(
        jnp.isclose(out_tr, 0.0, atol=1e-6),
        jnp.isclose(out_tr, ref * scale, rtol=1e-5, atol=1e-6),
    )
    assert bool(ok.all()), "dropout output not in {0, scaled(x+pe)}"
    drop_frac = float(jnp.mean((out_tr == 0.0).astype(jnp.float32)))
    assert 0.01 < drop_frac < 0.3, f"dropout fraction {drop_frac} far from p=0.1"

    print("KERNEL_OK")
</pallas_src>

<mosaic_0001>
module attributes {stable_mosaic.version = 11 : i64} {
  func.func @_pe_add_kernel(%arg0: i32, %arg1: memref<8x2x128xf32, #tpu.memory_space<vmem>>, %arg2: memref<8x1x128xf32, #tpu.memory_space<vmem>>, %arg3: memref<8x2x128xf32, #tpu.memory_space<vmem>>) attributes {dimension_semantics = [#tpu.dimension_semantics<parallel>], iteration_bounds = array<i64: 1>, scalar_prefetch = 0 : i64, scratch_operands = 0 : i64, tpu.core_type = #tpu.core_type<tc>, window_params = [{transform_indices = @transform_0, window_bounds = array<i64: 8, 2, 128>}, {transform_indices = @transform_1, window_bounds = array<i64: 8, 1, 128>}, {transform_indices = @transform_2, window_bounds = array<i64: 8, 2, 128>}]} {
    %c0 = arith.constant 0 : index
    %c0_0 = arith.constant 0 : index
    %c0_1 = arith.constant 0 : index
    %0 = vector.load %arg1[%c0, %c0_0, %c0_1] : memref<8x2x128xf32, #tpu.memory_space<vmem>>, vector<8x2x128xf32>
    %c0_2 = arith.constant 0 : index
    %c0_3 = arith.constant 0 : index
    %c0_4 = arith.constant 0 : index
    %1 = vector.load %arg2[%c0_2, %c0_3, %c0_4] : memref<8x1x128xf32, #tpu.memory_space<vmem>>, vector<8x1x128xf32>
    %2 = vector.broadcast %1 : vector<8x1x128xf32> to vector<8x2x128xf32>
    %3 = arith.addf %0, %2 : vector<8x2x128xf32>
    %c0_5 = arith.constant 0 : index
    %c0_6 = arith.constant 0 : index
    %c0_7 = arith.constant 0 : index
    %4 = vector.load %arg3[%c0_5, %c0_6, %c0_7] : memref<8x2x128xf32, #tpu.memory_space<vmem>>, vector<8x2x128xf32>
    tpu.vector_store %arg3[%c0_5, %c0_6, %c0_7], %3 {strides = array<i32>} : memref<8x2x128xf32, #tpu.memory_space<vmem>>, vector<8x2x128xf32>,
    return
  }
  func.func @transform_0(%arg0: i32) -> (i32, i32, i32) {
    %c0_i32 = arith.constant 0 : i32
    %c0_i32_0 = arith.constant 0 : i32
    %c0_i32_1 = arith.constant 0 : i32
    return %arg0, %c0_i32, %c0_i32_0 : i32, i32, i32
  }
  func.func @transform_1(%arg0: i32) -> (i32, i32, i32) {
    %c0_i32 = arith.constant 0 : i32
    %c0_i32_0 = arith.constant 0 : i32
    %c0_i32_1 = arith.constant 0 : i32
    return %arg0, %c0_i32, %c0_i32_0 : i32, i32, i32
  }
  func.func @transform_2(%arg0: i32) -> (i32, i32, i32) {
    %c0_i32 = arith.constant 0 : i32
    %c0_i32_0 = arith.constant 0 : i32
    %c0_i32_1 = arith.constant 0 : i32
    return %arg0, %c0_i32, %c0_i32_0 : i32, i32, i32
  }
}

</mosaic_0001>

<llo_original>
// kernel: tpu_custom_call.1
$region0: #{tpu_custom_call.1}
  #allocation0 [shape = 'u32[]', space=smem, size = 0x4, offset = 0x4, fixed_abs, tag = 'smem constant byte address 0x4 - core index']
  #allocation1 [shape = 'u32[144,128]{1,0:T(1,128)}', space=vmem, size = 0x12000, scoped, tag = 'internal scratch']
  %s0 = inlined_call_operand.hbm [shape: f32[8,2,128], index: 0, kind: input, shape index: {}]
  %s1 = inlined_call_operand.hbm [shape: f32[8,1,128], index: 1, kind: input, shape index: {}]
  %s2 = inlined_call_operand.hbm [shape: f32[8,2,128], index: 2, kind: output, shape index: {}]
  %s3 = sld [smem:[#allocation0]]
  $region26: #{tpu_custom_call.1} parent=0
    _
  %s5 = ssub.s32 1, %s3
  %s6 = scalar_select 0, %s5, %s3
  $region1: #{tpu_custom_call.1} parent=0
    #allocation2 [shape = 'u8[8192]{0}', space=vmem, size = 0x2000, scoped, tag = 'input window, operand 0, single buffered']
    #allocation3 [shape = 's32[1]{0}', space=sflag, size = 0x4, scoped, tag = 'scoped memory for tpu_custom_call.1']
    #allocation4 [shape = 's32[1]{0}', space=sflag, size = 0x4, scoped, tag = 'scoped memory for tpu_custom_call.1']
    #allocation5 [shape = 'u8[4096]{0}', space=vmem, size = 0x1000, scoped, tag = 'input window, operand 1, single buffered']
    #allocation6 [shape = 's32[1]{0}', space=sflag, size = 0x4, scoped, tag = 'scoped memory for tpu_custom_call.1']
    #allocation7 [shape = 'u8[8192]{0}', space=vmem, size = 0x2000, scoped, tag = 'output window, operand 0, single buffered']
    %7 = vsyncpa [#allocation3], 0
    %8 = vsyncpa [#allocation6], 0
    %9 = vsyncpa [#allocation4], 0
    // Predicated region
    $region2: #{tpu_custom_call.1} parent=1 // pred_check
      _
    $region3: #{tpu_custom_call.1} parent=1 // pred_check_branch
      %11 = sbr.rel (0) target = $region5
    $region4: #{tpu_custom_call.1} parent=1 // pred_region
      %s13 = ssub.s32 256, 256
      %14 = vsyncadd [#allocation3], %s13
      %s15 = sshll.u32 [#allocation2], 4
      %s16 = int_to_ptr.vmem [resolvable:$true] %s15
      %21 = dma.hbm_to_vmem [thread:$0]  %s0, 256, %s16, [#allocation3], 32, 32, 2
    $region5: #{tpu_custom_call.1} parent=1 // pred_fallthru
      _
    // Predicated region
    $region6: #{tpu_custom_call.1} parent=1 // pred_check
      _
    $region7: #{tpu_custom_call.1} parent=1 // pred_check_branch
      %23 = sbr.rel (0) target = $region9
    $region8: #{tpu_custom_call.1} parent=1 // pred_region
      %s25 = ssub.s32 128, 128
      %26 = vsyncadd [#allocation6], %s25
      %s27 = sshll.u32 [#allocation5], 4
      %s28 = int_to_ptr.vmem [resolvable:$true] %s27
      %33 = dma.hbm_to_vmem [thread:$0]  %s1, 128, %s28, [#allocation6], 16, 16, 1
    $region9: #{tpu_custom_call.1} parent=1 // pred_fallthru
      _
    // Predicated region
    $region10: #{tpu_custom_call.1} parent=1 // pred_check
      _
    $region11: #{tpu_custom_call.1} parent=1 // pred_check_branch
      %35 = sbr.rel (0) target = $region13
    $region12: #{tpu_custom_call.1} parent=1 // pred_region
      %36 = dma.done [#allocation3], 256
    $region13: #{tpu_custom_call.1} parent=1 // pred_fallthru
      _
    // Predicated region
    $region14: #{tpu_custom_call.1} parent=1 // pred_check
      _
    $region15: #{tpu_custom_call.1} parent=1 // pred_check_branch
      %38 = sbr.rel (0) target = $region17
    $region16: #{tpu_custom_call.1} parent=1 // pred_region
      %39 = dma.done [#allocation6], 128
    $region17: #{tpu_custom_call.1} parent=1 // pred_fallthru
      _
    %v40 = vld [vmem:[#allocation2] sm:$0x3]
    %v41 = vld [vmem:[#allocation2 + $0x2] sm:$0x3]
    %v42 = vld [vmem:[#allocation2 + $0x4] sm:$0x3]
    %v43 = vld [vmem:[#allocation2 + $0x6] sm:$0x3]
    %v44 = vld [vmem:[#allocation2 + $0x8] sm:$0x3]
    %v45 = vld [vmem:[#allocation2 + $0xa] sm:$0x3]
    %v46 = vld [vmem:[#allocation2 + $0xc] sm:$0x3]
    %v47 = vld [vmem:[#allocation2 + $0xe] sm:$0x3]
    %v48 = vld [vmem:[#allocation5] sm:$0x1]
    %v49 = vld [vmem:[#allocation5 + $0x1] sm:$0x1]
    %v50 = vld [vmem:[#allocation5 + $0x2] sm:$0x1]
    %v51 = vld [vmem:[#allocation5 + $0x3] sm:$0x1]
    %v52 = vld [vmem:[#allocation5 + $0x4] sm:$0x1]
    %v53 = vld [vmem:[#allocation5 + $0x5] sm:$0x1]
    %v54 = vld [vmem:[#allocation5 + $0x6] sm:$0x1]
    %v55 = vld [vmem:[#allocation5 + $0x7] sm:$0x1]
    %v64 = vlaneseq
    %v65 = vshrl.u32 %v64, 7
    %v66 = vsub.s32 0, %v65
    %v67 = vrot.slane %v48, %v66
    %v68 = vlaneseq
    %v69 = vshrl.u32 %v68, 7
    %v70 = vsub.s32 0, %v69
    %v71 = vrot.slane %v49, %v70
    %v72 = vlaneseq
    %v73 = vshrl.u32 %v72, 7
    %v74 = vsub.s32 0, %v73
    %v75 = vrot.slane %v50, %v74
    %v76 = vlaneseq
    %v77 = vshrl.u32 %v76, 7
    %v78 = vsub.s32 0, %v77
    %v79 = vrot.slane %v51, %v78
    %v80 = vlaneseq
    %v81 = vshrl.u32 %v80, 7
    %v82 = vsub.s32 0, %v81
    %v83 = vrot.slane %v52, %v82
    %v84 = vlaneseq
    %v85 = vshrl.u32 %v84, 7
    %v86 = vsub.s32 0, %v85
    %v87 = vrot.slane %v53, %v86
    %v88 = vlaneseq
    %v89 = vshrl.u32 %v88, 7
    %v90 = vsub.s32 0, %v89
    %v91 = vrot.slane %v54, %v90
    %v92 = vlaneseq
    %v93 = vshrl.u32 %v92, 7
    %v94 = vsub.s32 0, %v93
    %v95 = vrot.slane %v55, %v94
    %v104 = vadd.f32 %v40, %v67
    %v105 = vadd.f32 %v41, %v71
    %v106 = vadd.f32 %v42, %v75
    %v107 = vadd.f32 %v43, %v79
    %v108 = vadd.f32 %v44, %v83
    %v109 = vadd.f32 %v45, %v87
    %v110 = vadd.f32 %v46, %v91
    %v111 = vadd.f32 %v47, %v95
    %112 = vst [vmem:[#allocation7] sm:$0x3] %v104
    %113 = vst [vmem:[#allocation7 + $0x2] sm:$0x3] %v105
    %114 = vst [vmem:[#allocation7 + $0x4] sm:$0x3] %v106
    %115 = vst [vmem:[#allocation7 + $0x6] sm:$0x3] %v107
    %116 = vst [vmem:[#allocation7 + $0x8] sm:$0x3] %v108
    %117 = vst [vmem:[#allocation7 + $0xa] sm:$0x3] %v109
    %118 = vst [vmem:[#allocation7 + $0xc] sm:$0x3] %v110
    %119 = vst [vmem:[#allocation7 + $0xe] sm:$0x3] %v111
    // Predicated region
    $region18: #{tpu_custom_call.1} parent=1 // pred_check
      _
    $region19: #{tpu_custom_call.1} parent=1 // pred_check_branch
      %121 = sbr.rel (0) target = $region21
    $region20: #{tpu_custom_call.1} parent=1 // pred_region
      %s123 = ssub.s32 256, 256
      %124 = vsyncadd [#allocation4], %s123
      %s125 = sshll.u32 [#allocation7], 4
      %s126 = int_to_ptr.vmem [resolvable:$true] %s125
      %131 = dma.vmem_to_hbm [thread:$0]  %s126, 256, %s2, [#allocation4], 32, 32, 2
    $region21: #{tpu_custom_call.1} parent=1 // pred_fallthru
      _
    // Predicated region
    $region22: #{tpu_custom_call.1} parent=1 // pred_check
      _
    $region23: #{tpu_custom_call.1} parent=1 // pred_check_branch
      %133 = sbr.rel (0) target = $region25
    $region24: #{tpu_custom_call.1} parent=1 // pred_region
      %134 = dma.done [#allocation4], 256
    $region25: #{tpu_custom_call.1} parent=1 // pred_fallthru
      _
    %135 = vsyncpa [#allocation3], 1
    %136 = vsyncpa [#allocation6], 1
    %137 = vsyncpa [#allocation4], 1

</llo_original>
